<compile_context>
chip_gen: v5e
topology: v5e:2x2
jax: 0.10.0
libtpu: 0.0.40
codegen_flags: <defaults>
</compile_context>

<pallas_src>
import math

import jax
import jax.numpy as jnp
from jax import lax
from jax.experimental import pallas as pl
from jax.experimental.pallas import tpu as pltpu


_SQRT_HALF = 1.0 / math.sqrt(2.0)


def _gelu_exact(x):
    # PyTorch nn.GELU() default = exact erf-based GELU.  (jax.nn.gelu(approximate=True)
    # would move the transcendental to the EUP slot on v6e/v7x, but it changes numerics,
    # so the exact form is kept to preserve module semantics.)
    return 0.5 * x * (1.0 + lax.erf(x * _SQRT_HALF))


def _layernorm(v, w, b, eps):
    mu = jnp.mean(v, axis=-1, keepdims=True)
    var = jnp.mean((v - mu) ** 2, axis=-1, keepdims=True)
    return (v - mu) * lax.rsqrt(var + eps) * w + b


# ----------------------------------------------------------------------------------------
# Pass 1: row-local work — block LayerNorm, fc1 (split into u/v halves) + GELU, SGU LayerNorm
# ----------------------------------------------------------------------------------------
def _rowlocal_kernel(
    x_ref,
    norm_w_ref, norm_b_ref,
    fc1u_w_ref, fc1u_b_ref,
    fc1v_w_ref, fc1v_b_ref,
    sgu_norm_w_ref, sgu_norm_b_ref,
    xn_ref, u_ref, vn_ref,
):
    # Block LayerNorm(dim), eps=1e-6 — statistics in f32.
    x = x_ref[0].astype(jnp.float32)                                     # (TN, D)
    xn = _layernorm(x, norm_w_ref[...], norm_b_ref[...], 1e-6)
    xn_ref[0] = xn.astype(xn_ref.dtype)

    xn_bf = xn.astype(jnp.bfloat16)                                      # MXU operand

    # v-half of fc1 first, then its SGU LayerNorm (eps=1e-5, PyTorch default).
    # fc1 is split into halves so the full (TN, 4*D) intermediate is never live.
    v = jnp.dot(xn_bf, fc1v_w_ref[...],
                preferred_element_type=jnp.float32) + fc1v_b_ref[...]    # (TN, G) f32
    v = _gelu_exact(v)
    vn = _layernorm(v, sgu_norm_w_ref[...], sgu_norm_b_ref[...], 1e-5)
    vn_ref[0] = vn.astype(vn_ref.dtype)                                  # bf16

    # u-half of fc1.
    u = jnp.dot(xn_bf, fc1u_w_ref[...],
                preferred_element_type=jnp.float32) + fc1u_b_ref[...]    # (TN, G) f32
    u_ref[0] = _gelu_exact(u).astype(u_ref.dtype)                        # bf16


# ----------------------------------------------------------------------------------------
# Pass 2: spatial projection (needs full-sequence vn), gate, fc2, residual
# ----------------------------------------------------------------------------------------
def _spatial_gate_kernel(
    xn_ref, u_ref, vn_ref,
    proj_w_ref, proj_b_ref,
    fc2_w_ref, fc2_b_ref,
    o_ref,
):
    # vp[j, :] = Wp[j, :] @ vn + bp[j]   (row tile j of the seq axis)
    vp = jnp.dot(proj_w_ref[...], vn_ref[0],
                 preferred_element_type=jnp.float32) + proj_b_ref[...]   # (TN, G) f32
    g = u_ref[0].astype(jnp.float32) * vp                                # gate
    y = jnp.dot(g.astype(jnp.bfloat16), fc2_w_ref[...],
                preferred_element_type=jnp.float32) + fc2_b_ref[...]     # (TN, D) f32
    # Residual is added to the *normed* x, exactly as the PyTorch forward does.
    o_ref[0] = (xn_ref[0] + y).astype(o_ref.dtype)


def spatial_gating_block(x, params, *, seq_tile=256):
    B, N, D = x.shape
    CD = params["fc1_w"].shape[1]
    G = CD // 2

    # Sequence-axis tile: multiple of 16 (bf16 sublane packing) unless it covers all of N.
    tn = min(seq_tile, N)
    if tn != N:
        tn = max(16, (tn // 16) * 16)
    nt = pl.cdiv(N, tn)

    f32, bf16 = jnp.float32, jnp.bfloat16

    # Wrapper-side layout/dtype plumbing: split fc1 into its u/v halves and cast the matmul
    # weights to bf16; LayerNorm params and biases stay f32 (added to f32 accumulators).
    fc1u_w = params["fc1_w"][:, :G].astype(bf16)     # (D, G)
    fc1v_w = params["fc1_w"][:, G:].astype(bf16)     # (D, G)
    fc1u_b = params["fc1_b"][:, :G].astype(f32)      # (1, G)
    fc1v_b = params["fc1_b"][:, G:].astype(f32)      # (1, G)
    proj_w = params["sgu_proj_w"].astype(bf16)       # (N, N)
    proj_b = params["sgu_proj_b"].astype(f32)        # (N, 1)
    fc2_w = params["fc2_w"].astype(bf16)             # (G, D)
    fc2_b = params["fc2_b"].astype(f32)              # (1, D)
    norm_w = params["norm_w"].astype(f32)
    norm_b = params["norm_b"].astype(f32)
    sgu_norm_w = params["sgu_norm_w"].astype(f32)
    sgu_norm_b = params["sgu_norm_b"].astype(f32)

    def vmem_limit(single_copy_bytes):
        # Double-buffered blocks + headroom for compiler scratch, clamped so the request is
        # legal on every generation (v7x physical VMEM = 64 MiB; scoped default is 16-32 MiB).
        return int(min(max(2 * single_copy_bytes + (4 << 20), 32 << 20), 64 << 20))

    k1_bytes = (tn * D * 4                        # x tile
                + tn * D * 4 + 2 * tn * G * 2     # xn / u / vn output tiles
                + 2 * D * G * 2                   # fc1 u/v weight halves (bf16)
                + 2 * D * 4 + 4 * G * 4)          # LayerNorm params + biases
    k2_bytes = (tn * D * 4 + tn * G * 2           # xn / u tiles
                + N * G * 2                       # full-sequence vn (needed by Wp @ vn)
                + tn * N * 2 + tn * 4             # Wp row tile + bias
                + G * D * 2 + D * 4               # fc2 weight + bias
                + tn * D * 4)                     # output tile

    row_spec_dim = pl.BlockSpec((1, tn, D), lambda b, j: (b, j, 0))
    row_spec_gate = pl.BlockSpec((1, tn, G), lambda b, j: (b, j, 0))

    # ---- Pass 1 ----
    xn_hbm, u_hbm, vn_hbm = pl.pallas_call(
        _rowlocal_kernel,
        out_shape=(
            jax.ShapeDtypeStruct((B, N, D), f32),
            jax.ShapeDtypeStruct((B, N, G), bf16),
            jax.ShapeDtypeStruct((B, N, G), bf16),
        ),
        grid=(B, nt),
        in_specs=[
            row_spec_dim,                                     # x
            pl.BlockSpec((1, D), lambda b, j: (0, 0)),        # block norm w
            pl.BlockSpec((1, D), lambda b, j: (0, 0)),        # block norm b
            pl.BlockSpec((D, G), lambda b, j: (0, 0)),        # fc1 W^T (u half)
            pl.BlockSpec((1, G), lambda b, j: (0, 0)),        # fc1 b   (u half)
            pl.BlockSpec((D, G), lambda b, j: (0, 0)),        # fc1 W^T (v half)
            pl.BlockSpec((1, G), lambda b, j: (0, 0)),        # fc1 b   (v half)
            pl.BlockSpec((1, G), lambda b, j: (0, 0)),        # SGU norm w
            pl.BlockSpec((1, G), lambda b, j: (0, 0)),        # SGU norm b
        ],
        out_specs=(row_spec_dim, row_spec_gate, row_spec_gate),
        compiler_params=pltpu.CompilerParams(
            dimension_semantics=("parallel", "parallel"),
            vmem_limit_bytes=vmem_limit(k1_bytes),
        ),
    )(x, norm_w, norm_b, fc1u_w, fc1u_b, fc1v_w, fc1v_b, sgu_norm_w, sgu_norm_b)

    # ---- Pass 2 ----
    out = pl.pallas_call(
        _spatial_gate_kernel,
        out_shape=jax.ShapeDtypeStruct((B, N, D), x.dtype),
        grid=(B, nt),
        in_specs=[
            row_spec_dim,                                     # xn (residual input)
            row_spec_gate,                                    # u
            pl.BlockSpec((1, N, G), lambda b, j: (b, 0, 0)),  # vn, full sequence
            pl.BlockSpec((tn, N), lambda b, j: (j, 0)),       # Wp row tile
            pl.BlockSpec((tn, 1), lambda b, j: (j, 0)),       # bp row tile
            pl.BlockSpec((G, D), lambda b, j: (0, 0)),        # fc2 W^T
            pl.BlockSpec((1, D), lambda b, j: (0, 0)),        # fc2 b
        ],
        out_specs=row_spec_dim,
        compiler_params=pltpu.CompilerParams(
            dimension_semantics=("parallel", "parallel"),
            vmem_limit_bytes=vmem_limit(k2_bytes),
        ),
    )(xn_hbm, u_hbm, vn_hbm, proj_w, proj_b, fc2_w, fc2_b)
    return out


def reference(x, params, matmul_dtype=jnp.float32):
    """Pure-JAX reference matching the PyTorch forward.  With matmul_dtype=bfloat16 it
    mirrors the kernel's quantization points (operand casts, bf16 storage of u / vn)."""
    md = matmul_dtype
    c = lambda a: a.astype(md)
    G = params["fc1_w"].shape[1] // 2

    xn = _layernorm(x.astype(jnp.float32), params["norm_w"], params["norm_b"], 1e-6)
    u = _gelu_exact(jnp.einsum("bnd,dg->bng", c(xn), c(params["fc1_w"][:, :G]),
                               preferred_element_type=jnp.float32) + params["fc1_b"][:, :G])
    v = _gelu_exact(jnp.einsum("bnd,dg->bng", c(xn), c(params["fc1_w"][:, G:]),
                               preferred_element_type=jnp.float32) + params["fc1_b"][:, G:])
    vn = _layernorm(v, params["sgu_norm_w"], params["sgu_norm_b"], 1e-5)
    vp = jnp.einsum("jn,bng->bjg", c(params["sgu_proj_w"]), c(vn),
                    preferred_element_type=jnp.float32) + params["sgu_proj_b"]
    g = c(u).astype(jnp.float32) * vp
    y = jnp.einsum("bng,gd->bnd", c(g), c(params["fc2_w"]),
                   preferred_element_type=jnp.float32) + params["fc2_b"]
    return xn + y


if __name__ == "__main__":
    B, N, D = 2, 32, 16          # batch, seq_len, dim (small test; real dims should be 128-aligned)
    mlp_ratio = 4
    CD = D * mlp_ratio           # channel_dim = 64
    G = CD // 2                  # gate_dim = 32

    key = jax.random.PRNGKey(0)
    ks = jax.random.split(key, 10)

    def uinit(k, shape, fan_in):
        bound = 1.0 / math.sqrt(fan_in)
        return jax.random.uniform(k, shape, jnp.float32, -bound, bound)

    params = dict(
        norm_w=1.0 + 0.1 * jax.random.normal(ks[7], (1, D), jnp.float32),
        norm_b=0.1 * jax.random.normal(ks[8], (1, D), jnp.float32),
        fc1_w=uinit(ks[0], (D, CD), D),               # W^T of nn.Linear(dim, channel_dim)
        fc1_b=uinit(ks[1], (1, CD), D),
        sgu_norm_w=1.0 + 0.1 * jax.random.normal(ks[9], (1, G), jnp.float32),
        sgu_norm_b=jnp.zeros((1, G), jnp.float32),
        sgu_proj_w=uinit(ks[2], (N, N), N),           # nn.Linear(seq_len, seq_len) weight
        sgu_proj_b=uinit(ks[3], (N, 1), N),
        fc2_w=uinit(ks[4], (G, D), G),                # W^T of nn.Linear(gate_dim, dim)
        fc2_b=uinit(ks[5], (1, D), G),
    )
    x = jax.random.normal(ks[6], (B, N, D), jnp.float32)

    # seq_tile=16 -> grid (B, 2): exercises the sequence-tiled path on the small test shape.
    out = jax.block_until_ready(spatial_gating_block(x, params, seq_tile=16))
    assert out.shape == (B, N, D)

    ref_bf16 = reference(x, params, matmul_dtype=jnp.bfloat16)   # mirrors kernel quantization
    ref_f32 = reference(x, params, matmul_dtype=jnp.float32)     # exact PyTorch-equivalent math
    err_bf16 = float(jnp.max(jnp.abs(out - ref_bf16)))
    err_f32 = float(jnp.max(jnp.abs(out - ref_f32)))
    assert err_bf16 < 2e-2, ("mismatch vs bf16-matched reference", err_bf16)
    assert err_f32 < 2e-1, ("sanity check vs exact f32 reference", err_f32)
    print("KERNEL_OK")
</pallas_src>

<mosaic_0001>
module attributes {stable_mosaic.version = 11 : i64} {
  func.func @_rowlocal_kernel(%arg0: i32, %arg1: i32, %arg2: memref<1x16x16xf32, #tpu.memory_space<vmem>>, %arg3: memref<1x16xf32, #tpu.memory_space<vmem>>, %arg4: memref<1x16xf32, #tpu.memory_space<vmem>>, %arg5: memref<16x32xbf16, #tpu.memory_space<vmem>>, %arg6: memref<1x32xf32, #tpu.memory_space<vmem>>, %arg7: memref<16x32xbf16, #tpu.memory_space<vmem>>, %arg8: memref<1x32xf32, #tpu.memory_space<vmem>>, %arg9: memref<1x32xf32, #tpu.memory_space<vmem>>, %arg10: memref<1x32xf32, #tpu.memory_space<vmem>>, %arg11: memref<1x16x16xf32, #tpu.memory_space<vmem>>, %arg12: memref<1x16x32xbf16, #tpu.memory_space<vmem>>, %arg13: memref<1x16x32xbf16, #tpu.memory_space<vmem>>) attributes {dimension_semantics = [#tpu.dimension_semantics<parallel>, #tpu.dimension_semantics<parallel>], iteration_bounds = array<i64: 2, 2>, scalar_prefetch = 0 : i64, scratch_operands = 0 : i64, tpu.core_type = #tpu.core_type<tc>, window_params = [{transform_indices = @transform_0, window_bounds = array<i64: 1, 16, 16>}, {pipeline_mode = #tpu.pipeline_mode<synchronous>, transform_indices = @transform_1, window_bounds = array<i64: 1, 16>}, {pipeline_mode = #tpu.pipeline_mode<synchronous>, transform_indices = @transform_2, window_bounds = array<i64: 1, 16>}, {pipeline_mode = #tpu.pipeline_mode<synchronous>, transform_indices = @transform_3, window_bounds = array<i64: 16, 32>}, {pipeline_mode = #tpu.pipeline_mode<synchronous>, transform_indices = @transform_4, window_bounds = array<i64: 1, 32>}, {pipeline_mode = #tpu.pipeline_mode<synchronous>, transform_indices = @transform_5, window_bounds = array<i64: 16, 32>}, {pipeline_mode = #tpu.pipeline_mode<synchronous>, transform_indices = @transform_6, window_bounds = array<i64: 1, 32>}, {pipeline_mode = #tpu.pipeline_mode<synchronous>, transform_indices = @transform_7, window_bounds = array<i64: 1, 32>}, {pipeline_mode = #tpu.pipeline_mode<synchronous>, transform_indices = @transform_8, window_bounds = array<i64: 1, 32>}, {transform_indices = @transform_9, window_bounds = array<i64: 1, 16, 16>}, {transform_indices = @transform_10, window_bounds = array<i64: 1, 16, 32>}, {transform_indices = @transform_11, window_bounds = array<i64: 1, 16, 32>}]} {
    %c0 = arith.constant 0 : index
    %c0_0 = arith.constant 0 : index
    %c0_1 = arith.constant 0 : index
    %0 = vector.load %arg2[%c0, %c0_0, %c0_1] : memref<1x16x16xf32, #tpu.memory_space<vmem>>, vector<1x16x16xf32>
    %1 = vector.shape_cast %0 : vector<1x16x16xf32> to vector<16x16xf32>
    %c0_2 = arith.constant 0 : index
    %c0_3 = arith.constant 0 : index
    %2 = vector.load %arg3[%c0_2, %c0_3] : memref<1x16xf32, #tpu.memory_space<vmem>>, vector<1x16xf32>
    %c0_4 = arith.constant 0 : index
    %c0_5 = arith.constant 0 : index
    %3 = vector.load %arg4[%c0_4, %c0_5] : memref<1x16xf32, #tpu.memory_space<vmem>>, vector<1x16xf32>
    %cst = arith.constant dense<0.000000e+00> : vector<16xf32>
    %4 = vector.multi_reduction <add>, %1, %cst [1] : vector<16x16xf32> to vector<16xf32>
    %5 = vector.shape_cast %4 : vector<16xf32> to vector<16x1xf32>
    %cst_6 = arith.constant 1.600000e+01 : f32
    %6 = vector.broadcast %cst_6 : f32 to vector<16x1xf32>
    %7 = arith.divf %5, %6 : vector<16x1xf32>
    %8 = vector.broadcast %7 : vector<16x1xf32> to vector<16x16xf32>
    %9 = arith.subf %1, %8 : vector<16x16xf32>
    %10 = arith.mulf %9, %9 : vector<16x16xf32>
    %cst_7 = arith.constant dense<0.000000e+00> : vector<16xf32>
    %11 = vector.multi_reduction <add>, %10, %cst_7 [1] : vector<16x16xf32> to vector<16xf32>
    %12 = vector.shape_cast %11 : vector<16xf32> to vector<16x1xf32>
    %cst_8 = arith.constant 1.600000e+01 : f32
    %13 = vector.broadcast %cst_8 : f32 to vector<16x1xf32>
    %14 = arith.divf %12, %13 : vector<16x1xf32>
    %15 = vector.broadcast %7 : vector<16x1xf32> to vector<16x16xf32>
    %16 = arith.subf %1, %15 : vector<16x16xf32>
    %cst_9 = arith.constant 9.99999997E-7 : f32
    %17 = vector.broadcast %cst_9 : f32 to vector<16x1xf32>
    %18 = arith.addf %14, %17 : vector<16x1xf32>
    %19 = math.rsqrt %18 : vector<16x1xf32>
    %20 = vector.broadcast %19 : vector<16x1xf32> to vector<16x16xf32>
    %21 = arith.mulf %16, %20 : vector<16x16xf32>
    %22 = vector.broadcast %2 : vector<1x16xf32> to vector<16x16xf32>
    %23 = arith.mulf %21, %22 : vector<16x16xf32>
    %24 = vector.broadcast %3 : vector<1x16xf32> to vector<16x16xf32>
    %25 = arith.addf %23, %24 : vector<16x16xf32>
    %c0_10 = arith.constant 0 : index
    %c0_11 = arith.constant 0 : index
    %c0_12 = arith.constant 0 : index
    %26 = vector.load %arg11[%c0_10, %c0_11, %c0_12] : memref<1x16x16xf32, #tpu.memory_space<vmem>>, vector<1x16x16xf32>
    %27 = vector.shape_cast %26 : vector<1x16x16xf32> to vector<16x16xf32>
    %28 = vector.shape_cast %25 : vector<16x16xf32> to vector<1x16x16xf32>
    tpu.vector_store %arg11[%c0_10, %c0_11, %c0_12], %28 {strides = array<i32>} : memref<1x16x16xf32, #tpu.memory_space<vmem>>, vector<1x16x16xf32>,
    %29 = arith.truncf %25 : vector<16x16xf32> to vector<16x16xbf16>
    %c0_13 = arith.constant 0 : index
    %c0_14 = arith.constant 0 : index
    %30 = vector.load %arg7[%c0_13, %c0_14] : memref<16x32xbf16, #tpu.memory_space<vmem>>, vector<16x32xbf16>
    %cst_15 = arith.constant dense<0.000000e+00> : vector<16x32xf32>
    %31 = tpu.matmul %29, %30, %cst_15 {dimension_numbers = #tpu.dot_dimension_numbers<[1], [0], [0], [1], [0, 0, 1, 1], [], []>} : vector<16x16xbf16>, vector<16x32xbf16>, vector<16x32xf32> -> vector<16x32xf32>
    %c0_16 = arith.constant 0 : index
    %c0_17 = arith.constant 0 : index
    %32 = vector.load %arg8[%c0_16, %c0_17] : memref<1x32xf32, #tpu.memory_space<vmem>>, vector<1x32xf32>
    %33 = vector.broadcast %32 : vector<1x32xf32> to vector<16x32xf32>
    %34 = arith.addf %31, %33 : vector<16x32xf32>
    %cst_18 = arith.constant 5.000000e-01 : f32
    %35 = vector.broadcast %cst_18 : f32 to vector<16x32xf32>
    %36 = arith.mulf %35, %34 : vector<16x32xf32>
    %cst_19 = arith.constant 0.707106769 : f32
    %37 = vector.broadcast %cst_19 : f32 to vector<16x32xf32>
    %38 = arith.mulf %34, %37 : vector<16x32xf32>
    %39 = math.erf %38 : vector<16x32xf32>
    %cst_20 = arith.constant 1.000000e+00 : f32
    %40 = vector.broadcast %cst_20 : f32 to vector<16x32xf32>
    %41 = arith.addf %40, %39 : vector<16x32xf32>
    %42 = arith.mulf %36, %41 : vector<16x32xf32>
    %c0_21 = arith.constant 0 : index
    %c0_22 = arith.constant 0 : index
    %43 = vector.load %arg9[%c0_21, %c0_22] : memref<1x32xf32, #tpu.memory_space<vmem>>, vector<1x32xf32>
    %c0_23 = arith.constant 0 : index
    %c0_24 = arith.constant 0 : index
    %44 = vector.load %arg10[%c0_23, %c0_24] : memref<1x32xf32, #tpu.memory_space<vmem>>, vector<1x32xf32>
    %cst_25 = arith.constant dense<0.000000e+00> : vector<16xf32>
    %45 = vector.multi_reduction <add>, %42, %cst_25 [1] : vector<16x32xf32> to vector<16xf32>
    %46 = vector.shape_cast %45 : vector<16xf32> to vector<16x1xf32>
    %cst_26 = arith.constant 3.200000e+01 : f32
    %47 = vector.broadcast %cst_26 : f32 to vector<16x1xf32>
    %48 = arith.divf %46, %47 : vector<16x1xf32>
    %49 = vector.broadcast %48 : vector<16x1xf32> to vector<16x32xf32>
    %50 = arith.subf %42, %49 : vector<16x32xf32>
    %51 = arith.mulf %50, %50 : vector<16x32xf32>
    %cst_27 = arith.constant dense<0.000000e+00> : vector<16xf32>
    %52 = vector.multi_reduction <add>, %51, %cst_27 [1] : vector<16x32xf32> to vector<16xf32>
    %53 = vector.shape_cast %52 : vector<16xf32> to vector<16x1xf32>
    %cst_28 = arith.constant 3.200000e+01 : f32
    %54 = vector.broadcast %cst_28 : f32 to vector<16x1xf32>
    %55 = arith.divf %53, %54 : vector<16x1xf32>
    %56 = vector.broadcast %48 : vector<16x1xf32> to vector<16x32xf32>
    %57 = arith.subf %42, %56 : vector<16x32xf32>
    %cst_29 = arith.constant 9.99999974E-6 : f32
    %58 = vector.broadcast %cst_29 : f32 to vector<16x1xf32>
    %59 = arith.addf %55, %58 : vector<16x1xf32>
    %60 = math.rsqrt %59 : vector<16x1xf32>
    %61 = vector.broadcast %60 : vector<16x1xf32> to vector<16x32xf32>
    %62 = arith.mulf %57, %61 : vector<16x32xf32>
    %63 = vector.broadcast %43 : vector<1x32xf32> to vector<16x32xf32>
    %64 = arith.mulf %62, %63 : vector<16x32xf32>
    %65 = vector.broadcast %44 : vector<1x32xf32> to vector<16x32xf32>
    %66 = arith.addf %64, %65 : vector<16x32xf32>
    %67 = arith.truncf %66 : vector<16x32xf32> to vector<16x32xbf16>
    %c0_30 = arith.constant 0 : index
    %c0_31 = arith.constant 0 : index
    %c0_32 = arith.constant 0 : index
    %68 = vector.load %arg13[%c0_30, %c0_31, %c0_32] : memref<1x16x32xbf16, #tpu.memory_space<vmem>>, vector<1x16x32xbf16>
    %69 = vector.shape_cast %68 : vector<1x16x32xbf16> to vector<16x32xbf16>
    %70 = vector.shape_cast %67 : vector<16x32xbf16> to vector<1x16x32xbf16>
    tpu.vector_store %arg13[%c0_30, %c0_31, %c0_32], %70 {strides = array<i32>} : memref<1x16x32xbf16, #tpu.memory_space<vmem>>, vector<1x16x32xbf16>,
    %c0_33 = arith.constant 0 : index
    %c0_34 = arith.constant 0 : index
    %71 = vector.load %arg5[%c0_33, %c0_34] : memref<16x32xbf16, #tpu.memory_space<vmem>>, vector<16x32xbf16>
    %cst_35 = arith.constant dense<0.000000e+00> : vector<16x32xf32>
    %72 = tpu.matmul %29, %71, %cst_35 {dimension_numbers = #tpu.dot_dimension_numbers<[1], [0], [0], [1], [0, 0, 1, 1], [], []>} : vector<16x16xbf16>, vector<16x32xbf16>, vector<16x32xf32> -> vector<16x32xf32>
    %c0_36 = arith.constant 0 : index
    %c0_37 = arith.constant 0 : index
    %73 = vector.load %arg6[%c0_36, %c0_37] : memref<1x32xf32, #tpu.memory_space<vmem>>, vector<1x32xf32>
    %74 = vector.broadcast %73 : vector<1x32xf32> to vector<16x32xf32>
    %75 = arith.addf %72, %74 : vector<16x32xf32>
    %cst_38 = arith.constant 5.000000e-01 : f32
    %76 = vector.broadcast %cst_38 : f32 to vector<16x32xf32>
    %77 = arith.mulf %76, %75 : vector<16x32xf32>
    %cst_39 = arith.constant 0.707106769 : f32
    %78 = vector.broadcast %cst_39 : f32 to vector<16x32xf32>
    %79 = arith.mulf %75, %78 : vector<16x32xf32>
    %80 = math.erf %79 : vector<16x32xf32>
    %cst_40 = arith.constant 1.000000e+00 : f32
    %81 = vector.broadcast %cst_40 : f32 to vector<16x32xf32>
    %82 = arith.addf %81, %80 : vector<16x32xf32>
    %83 = arith.mulf %77, %82 : vector<16x32xf32>
    %84 = arith.truncf %83 : vector<16x32xf32> to vector<16x32xbf16>
    %c0_41 = arith.constant 0 : index
    %c0_42 = arith.constant 0 : index
    %c0_43 = arith.constant 0 : index
    %85 = vector.load %arg12[%c0_41, %c0_42, %c0_43] : memref<1x16x32xbf16, #tpu.memory_space<vmem>>, vector<1x16x32xbf16>
    %86 = vector.shape_cast %85 : vector<1x16x32xbf16> to vector<16x32xbf16>
    %87 = vector.shape_cast %84 : vector<16x32xbf16> to vector<1x16x32xbf16>
    tpu.vector_store %arg12[%c0_41, %c0_42, %c0_43], %87 {strides = array<i32>} : memref<1x16x32xbf16, #tpu.memory_space<vmem>>, vector<1x16x32xbf16>,
    return
  }
  func.func @transform_0(%arg0: i32, %arg1: i32) -> (i32, i32, i32) {
    %c0_i32 = arith.constant 0 : i32
    %c0_i32_0 = arith.constant 0 : i32
    return %arg0, %arg1, %c0_i32 : i32, i32, i32
  }
  func.func @transform_1(%arg0: i32, %arg1: i32) -> (i32, i32) {
    %c0_i32 = arith.constant 0 : i32
    %c0_i32_0 = arith.constant 0 : i32
    %c0_i32_1 = arith.constant 0 : i32
    return %c0_i32, %c0_i32_0 : i32, i32
  }
  func.func @transform_2(%arg0: i32, %arg1: i32) -> (i32, i32) {
    %c0_i32 = arith.constant 0 : i32
    %c0_i32_0 = arith.constant 0 : i32
    %c0_i32_1 = arith.constant 0 : i32
    return %c0_i32, %c0_i32_0 : i32, i32
  }
  func.func @transform_3(%arg0: i32, %arg1: i32) -> (i32, i32) {
    %c0_i32 = arith.constant 0 : i32
    %c0_i32_0 = arith.constant 0 : i32
    %c0_i32_1 = arith.constant 0 : i32
    return %c0_i32, %c0_i32_0 : i32, i32
  }
  func.func @transform_4(%arg0: i32, %arg1: i32) -> (i32, i32) {
    %c0_i32 = arith.constant 0 : i32
    %c0_i32_0 = arith.constant 0 : i32
    %c0_i32_1 = arith.constant 0 : i32
    return %c0_i32, %c0_i32_0 : i32, i32
  }
  func.func @transform_5(%arg0: i32, %arg1: i32) -> (i32, i32) {
    %c0_i32 = arith.constant 0 : i32
    %c0_i32_0 = arith.constant 0 : i32
    %c0_i32_1 = arith.constant 0 : i32
    return %c0_i32, %c0_i32_0 : i32, i32
  }
  func.func @transform_6(%arg0: i32, %arg1: i32) -> (i32, i32) {
    %c0_i32 = arith.constant 0 : i32
    %c0_i32_0 = arith.constant 0 : i32
    %c0_i32_1 = arith.constant 0 : i32
    return %c0_i32, %c0_i32_0 : i32, i32
  }
  func.func @transform_7(%arg0: i32, %arg1: i32) -> (i32, i32) {
    %c0_i32 = arith.constant 0 : i32
    %c0_i32_0 = arith.constant 0 : i32
    %c0_i32_1 = arith.constant 0 : i32
    return %c0_i32, %c0_i32_0 : i32, i32
  }
  func.func @transform_8(%arg0: i32, %arg1: i32) -> (i32, i32) {
    %c0_i32 = arith.constant 0 : i32
    %c0_i32_0 = arith.constant 0 : i32
    %c0_i32_1 = arith.constant 0 : i32
    return %c0_i32, %c0_i32_0 : i32, i32
  }
  func.func @transform_9(%arg0: i32, %arg1: i32) -> (i32, i32, i32) {
    %c0_i32 = arith.constant 0 : i32
    %c0_i32_0 = arith.constant 0 : i32
    return %arg0, %arg1, %c0_i32 : i32, i32, i32
  }
  func.func @transform_10(%arg0: i32, %arg1: i32) -> (i32, i32, i32) {
    %c0_i32 = arith.constant 0 : i32
    %c0_i32_0 = arith.constant 0 : i32
    return %arg0, %arg1, %c0_i32 : i32, i32, i32
  }
  func.func @transform_11(%arg0: i32, %arg1: i32) -> (i32, i32, i32) {
    %c0_i32 = arith.constant 0 : i32
    %c0_i32_0 = arith.constant 0 : i32
    return %arg0, %arg1, %c0_i32 : i32, i32, i32
  }
}

</mosaic_0001>

<llo_original>
// kernel: tpu_custom_call.1
$region0: #{tpu_custom_call.1}
  #allocation0 [shape = 'u32[]', space=smem, size = 0x4, offset = 0x4, fixed_abs, tag = 'smem constant byte address 0x4 - core index']
  #allocation1 [shape = 'u32[72,128]{1,0:T(1,128)}', space=vmem, size = 0x9000, scoped, tag = 'internal scratch']
  %s0 = inlined_call_operand.vmem [shape: f32[2,32,16], index: 0, kind: input, shape index: {}]
  %s1 = inlined_call_operand.vmem [shape: f32[1,16], index: 1, kind: input, shape index: {}]
  %s2 = inlined_call_operand.vmem [shape: f32[1,16], index: 2, kind: input, shape index: {}]
  %s3 = inlined_call_operand.vmem [shape: bf16[16,32], index: 3, kind: input, shape index: {}]
  %s4 = inlined_call_operand.vmem [shape: f32[1,32], index: 4, kind: input, shape index: {}]
  %s5 = inlined_call_operand.vmem [shape: bf16[16,32], index: 5, kind: input, shape index: {}]
  %s6 = inlined_call_operand.vmem [shape: f32[1,32], index: 6, kind: input, shape index: {}]
  %s7 = inlined_call_operand.vmem [shape: f32[1,32], index: 7, kind: input, shape index: {}]
  %s8 = inlined_call_operand.vmem [shape: f32[1,32], index: 8, kind: input, shape index: {}]
  %s9 = inlined_call_operand.vmem [shape: f32[2,32,16], index: 9, kind: output, shape index: {0}]
  %s10 = inlined_call_operand.hbm [shape: bf16[2,32,32], index: 10, kind: output, shape index: {1}]
  %s11 = inlined_call_operand.hbm [shape: bf16[2,32,32], index: 11, kind: output, shape index: {2}]
  %12 = xla_tuple %s9, %s10, %s11
  %s13 = sld [smem:[#allocation0]]
  $region85: #{tpu_custom_call.1} parent=0
    _
  %s15 = ssub.s32 1, %s13
  %s16 = scalar_select 0, %s15, %s13
  $region1: #{tpu_custom_call.1} parent=0
    #allocation2 [shape = 'u8[8192]{0}', space=vmem, size = 0x2000, scoped, tag = 'output window, operand 1']
    #allocation3 [shape = 's32[2]{0}', space=sflag, size = 0x8, scoped, tag = 'scoped memory for tpu_custom_call.1']
    #allocation4 [shape = 'u8[8192]{0}', space=vmem, size = 0x2000, scoped, tag = 'output window, operand 2']
    #allocation5 [shape = 's32[2]{0}', space=sflag, size = 0x8, scoped, tag = 'scoped memory for tpu_custom_call.1']
    %17 = vsyncpa [#allocation3], 0
    %s18 = scalar_lea.sflag [#allocation3], 1
    %19 = vsyncpa %s18, 0
    %20 = vsyncpa [#allocation5], 0
    %s21 = scalar_lea.sflag [#allocation5], 1
    %22 = vsyncpa %s21, 0
    loop: start=0, step=1, limit=6
    $region2: #{tpu_custom_call.1} parent=1 // loop_pre_header
      _
    $region3: #{tpu_custom_call.1} parent=1 // loop_header
      %s24 = sphi 0, %s28
      %p25 = scmp.ge.s32.totalorder %s24, 6
      %s31 = sphi 0, %s43
      %s32 = sphi 0, %s39
      %s33 = sphi 0, %s31
      %s34 = sphi 0, %s32
      %s35 = sphi 0, %s33
      %s36 = sphi 0, %s34
      %s48 = sphi 0, %s50
      %s51 = sphi 0, %s48
      %s52 = sphi 0, %s51
      %s68 = sphi 0, %s52
      %s72 = sphi 0, %s72
      %s74 = sphi 0, %s72
      %s75 = sphi 0, %s74
      %s89 = sphi 0, %s75
      %s93 = sphi 0, %s93
      %s95 = sphi 0, %s93
      %s96 = sphi 0, %s95
      %s110 = sphi 0, %s96
      %s114 = sphi 0, %s114
      %s116 = sphi 0, %s114
      %s117 = sphi 0, %s116
      %s131 = sphi 0, %s117
      %s135 = sphi 0, %s135
      %s137 = sphi 0, %s135
      %s138 = sphi 0, %s137
      %s152 = sphi 0, %s138
      %s156 = sphi 0, %s156
      %s158 = sphi 0, %s156
      %s159 = sphi 0, %s158
      %s173 = sphi 0, %s159
      %s177 = sphi 0, %s177
      %s179 = sphi 0, %s177
      %s180 = sphi 0, %s179
      %s194 = sphi 0, %s180
      %s198 = sphi 0, %s198
      %s200 = sphi 0, %s198
      %s201 = sphi 0, %s200
      %s215 = sphi 0, %s201
      %s219 = sphi 0, %s219
      %s221 = sphi 0, %s219
      %s222 = sphi 0, %s221
      %s236 = sphi 0, %s222
      %s244 = sphi 0, %s246
      %s247 = sphi 0, %s244
      %s248 = sphi 0, %s247
      %s264 = sphi 0, %s248
      %s272 = sphi 0, %s274
      %s275 = sphi 0, %s272
      %s276 = sphi 0, %s275
      %s292 = sphi 0, %s276
      %s300 = sphi 0, %s302
      %s303 = sphi 0, %s300
      %s304 = sphi 0, %s303
      %s320 = sphi 0, %s304
    $region4: #{tpu_custom_call.1} parent=1 // loop_header_branch
      %27 = sbr.rel (%p25) target = $region8
    $region5: #{tpu_custom_call.1} parent=1 // loop_body
      %s29 = ssub.s32 %s24, 1
      %s30 = ssub.s32 %s24, 2
      %s37 = sadd.s32 1, %s32
      %p38 = scmp.ge.s32.totalorder %s37, 2
      %s39 = scalar_select %p38, 0, %s37
      %s40 = sadd.s32 1, %s31
      %s41 = scalar_select %p38, %s40, %s31
      %p42 = scmp.ge.s32.totalorder %s41, 2
      %s43 = scalar_select %p42, 0, %s41
      %s44 = ssub.s32 %s31, %s43
      %s45 = ssub.s32 %s32, %s39
      %s46 = sor.u32 %s44, %s45
      %p47 = scmp.eq.s32.totalorder %s46, 0
      %s49 = sadd.s32 %s48, 1
      %s50 = scalar_select %p47, %s48, %s49
      %p53 = pneg %p47
      %p54 = scmp.eq.s32.totalorder %s24, 3
      %p55 = por %p53, %p54
      %p56 = scmp.ne.s32.totalorder %s48, %s51
      %p57 = scmp.eq.s32.totalorder %s24, 0
      %p58 = por %p56, %p57
      %p59 = scmp.ne.s32.totalorder %s48, %s51
      %p60 = scmp.eq.s32.totalorder %s29, 3
      %p61 = por %p59, %p60
      %p62 = scmp.ne.s32.totalorder %s51, %s52
      %p63 = scmp.eq.s32.totalorder %s29, 0
      %p64 = por %p62, %p63
      %p65 = scmp.ne.s32.totalorder %s51, %s52
      %p66 = scmp.eq.s32.totalorder %s30, 3
      %p67 = por %p65, %p66
      %p69 = scmp.ne.s32.totalorder %s52, %s68
      %p70 = scmp.eq.s32.totalorder %s30, 0
      %p71 = por %p69, %p70
      %s73 = sadd.s32 %s72, 1
      %p76 = scmp.eq.s32.totalorder %s24, 3
      %p77 = scmp.ne.s32.totalorder %s72, %s74
      %p78 = scmp.eq.s32.totalorder %s24, 0
      %p79 = por %p77, %p78
      %p80 = scmp.ne.s32.totalorder %s72, %s74
      %p81 = scmp.eq.s32.totalorder %s29, 3
      %p82 = por %p80, %p81
      %p83 = scmp.ne.s32.totalorder %s74, %s75
      %p84 = scmp.eq.s32.totalorder %s29, 0
      %p85 = por %p83, %p84
      %p86 = scmp.ne.s32.totalorder %s74, %s75
      %p87 = scmp.eq.s32.totalorder %s30, 3
      %p88 = por %p86, %p87
      %p90 = scmp.ne.s32.totalorder %s75, %s89
      %p91 = scmp.eq.s32.totalorder %s30, 0
      %p92 = por %p90, %p91
      %s94 = sadd.s32 %s93, 1
      %p97 = scmp.eq.s32.totalorder %s24, 3
      %p98 = scmp.ne.s32.totalorder %s93, %s95
      %p99 = scmp.eq.s32.totalorder %s24, 0
      %p100 = por %p98, %p99
      %p101 = scmp.ne.s32.totalorder %s93, %s95
      %p102 = scmp.eq.s32.totalorder %s29, 3
      %p103 = por %p101, %p102
      %p104 = scmp.ne.s32.totalorder %s95, %s96
      %p105 = scmp.eq.s32.totalorder %s29, 0
      %p106 = por %p104, %p105
      %p107 = scmp.ne.s32.totalorder %s95, %s96
      %p108 = scmp.eq.s32.totalorder %s30, 3
      %p109 = por %p107, %p108
      %p111 = scmp.ne.s32.totalorder %s96, %s110
      %p112 = scmp.eq.s32.totalorder %s30, 0
      %p113 = por %p111, %p112
      %s115 = sadd.s32 %s114, 1
      %p118 = scmp.eq.s32.totalorder %s24, 3
      %p119 = scmp.ne.s32.totalorder %s114, %s116
      %p120 = scmp.eq.s32.totalorder %s24, 0
      %p121 = por %p119, %p120
      %p122 = scmp.ne.s32.totalorder %s114, %s116
      %p123 = scmp.eq.s32.totalorder %s29, 3
      %p124 = por %p122, %p123
      %p125 = scmp.ne.s32.totalorder %s116, %s117
      %p126 = scmp.eq.s32.totalorder %s29, 0
      %p127 = por %p125, %p126
      %p128 = scmp.ne.s32.totalorder %s116, %s117
      %p129 = scmp.eq.s32.totalorder %s30, 3
      %p130 = por %p128, %p129
      %p132 = scmp.ne.s32.totalorder %s117, %s131
      %p133 = scmp.eq.s32.totalorder %s30, 0
      %p134 = por %p132, %p133
      %s136 = sadd.s32 %s135, 1
      %p139 = scmp.eq.s32.totalorder %s24, 3
      %p140 = scmp.ne.s32.totalorder %s135, %s137
      %p141 = scmp.eq.s32.totalorder %s24, 0
      %p142 = por %p140, %p141
      %p143 = scmp.ne.s32.totalorder %s135, %s137
      %p144 = scmp.eq.s32.totalorder %s29, 3
      %p145 = por %p143, %p144
      %p146 = scmp.ne.s32.totalorder %s137, %s138
      %p147 = scmp.eq.s32.totalorder %s29, 0
      %p148 = por %p146, %p147
      %p149 = scmp.ne.s32.totalorder %s137, %s138
      %p150 = scmp.eq.s32.totalorder %s30, 3
      %p151 = por %p149, %p150
      %p153 = scmp.ne.s32.totalorder %s138, %s152
      %p154 = scmp.eq.s32.totalorder %s30, 0
      %p155 = por %p153, %p154
      %s157 = sadd.s32 %s156, 1
      %p160 = scmp.eq.s32.totalorder %s24, 3
      %p161 = scmp.ne.s32.totalorder %s156, %s158
      %p162 = scmp.eq.s32.totalorder %s24, 0
      %p163 = por %p161, %p162
      %p164 = scmp.ne.s32.totalorder %s156, %s158
      %p165 = scmp.eq.s32.totalorder %s29, 3
      %p166 = por %p164, %p165
      %p167 = scmp.ne.s32.totalorder %s158, %s159
      %p168 = scmp.eq.s32.totalorder %s29, 0
      %p169 = por %p167, %p168
      %p170 = scmp.ne.s32.totalorder %s158, %s159
      %p171 = scmp.eq.s32.totalorder %s30, 3
      %p172 = por %p170, %p171
      %p174 = scmp.ne.s32.totalorder %s159, %s173
      %p175 = scmp.eq.s32.totalorder %s30, 0
      %p176 = por %p174, %p175
      %s178 = sadd.s32 %s177, 1
      %p181 = scmp.eq.s32.totalorder %s24, 3
      %p182 = scmp.ne.s32.totalorder %s177, %s179
      %p183 = scmp.eq.s32.totalorder %s24, 0
      %p184 = por %p182, %p183
      %p185 = scmp.ne.s32.totalorder %s177, %s179
      %p186 = scmp.eq.s32.totalorder %s29, 3
      %p187 = por %p185, %p186
      %p188 = scmp.ne.s32.totalorder %s179, %s180
      %p189 = scmp.eq.s32.totalorder %s29, 0
      %p190 = por %p188, %p189
      %p191 = scmp.ne.s32.totalorder %s179, %s180
      %p192 = scmp.eq.s32.totalorder %s30, 3
      %p193 = por %p191, %p192
      %p195 = scmp.ne.s32.totalorder %s180, %s194
      %p196 = scmp.eq.s32.totalorder %s30, 0
      %p197 = por %p195, %p196
      %s199 = sadd.s32 %s198, 1
      %p202 = scmp.eq.s32.totalorder %s24, 3
      %p203 = scmp.ne.s32.totalorder %s198, %s200
      %p204 = scmp.eq.s32.totalorder %s24, 0
      %p205 = por %p203, %p204
      %p206 = scmp.ne.s32.totalorder %s198, %s200
      %p207 = scmp.eq.s32.totalorder %s29, 3
      %p208 = por %p206, %p207
      %p209 = scmp.ne.s32.totalorder %s200, %s201
      %p210 = scmp.eq.s32.totalorder %s29, 0
      %p211 = por %p209, %p210
      %p212 = scmp.ne.s32.totalorder %s200, %s201
      %p213 = scmp.eq.s32.totalorder %s30, 3
      %p214 = por %p212, %p213
      %p216 = scmp.ne.s32.totalorder %s201, %s215
      %p217 = scmp.eq.s32.totalorder %s30, 0
      %p218 = por %p216, %p217
      %s220 = sadd.s32 %s219, 1
      %p223 = scmp.eq.s32.totalorder %s24, 3
      %p224 = scmp.ne.s32.totalorder %s219, %s221
      %p225 = scmp.eq.s32.totalorder %s24, 0
      %p226 = por %p224, %p225
      %p227 = scmp.ne.s32.totalorder %s219, %s221
      %p228 = scmp.eq.s32.totalorder %s29, 3
      %p229 = por %p227, %p228
      %p230 = scmp.ne.s32.totalorder %s221, %s222
      %p231 = scmp.eq.s32.totalorder %s29, 0
      %p232 = por %p230, %p231
      %p233 = scmp.ne.s32.totalorder %s221, %s222
      %p234 = scmp.eq.s32.totalorder %s30, 3
      %p235 = por %p233, %p234
      %p237 = scmp.ne.s32.totalorder %s222, %s236
      %p238 = scmp.eq.s32.totalorder %s30, 0
      %p239 = por %p237, %p238
      %s240 = ssub.s32 %s31, %s43
      %s241 = ssub.s32 %s32, %s39
      %s242 = sor.u32 %s240, %s241
      %p243 = scmp.eq.s32.totalorder %s242, 0
      %s245 = sadd.s32 %s244, 1
      %s246 = scalar_select %p243, %s244, %s245
      %p249 = pneg %p243
      %p250 = scmp.eq.s32.totalorder %s24, 3
      %p251 = por %p249, %p250
      %p252 = scmp.ne.s32.totalorder %s244, %s247
      %p253 = scmp.eq.s32.totalorder %s24, 0
      %p254 = por %p252, %p253
      %p255 = scmp.ne.s32.totalorder %s244, %s247
      %p256 = scmp.eq.s32.totalorder %s29, 3
      %p257 = por %p255, %p256
      %p258 = scmp.ne.s32.totalorder %s247, %s248
      %p259 = scmp.eq.s32.totalorder %s29, 0
      %p260 = por %p258, %p259
      %p261 = scmp.ne.s32.totalorder %s247, %s248
      %p262 = scmp.eq.s32.totalorder %s30, 3
      %p263 = por %p261, %p262
      %p265 = scmp.ne.s32.totalorder %s248, %s264
      %p266 = scmp.eq.s32.totalorder %s30, 0
      %p267 = por %p265, %p266
      %s268 = ssub.s32 %s31, %s43
      %s269 = ssub.s32 %s32, %s39
      %s270 = sor.u32 %s268, %s269
      %p271 = scmp.eq.s32.totalorder %s270, 0
      %s273 = sadd.s32 %s272, 1
      %s274 = scalar_select %p271, %s272, %s273
      %p277 = pneg %p271
      %p278 = scmp.eq.s32.totalorder %s24, 3
      %p279 = por %p277, %p278
      %p280 = scmp.ne.s32.totalorder %s272, %s275
      %p281 = scmp.eq.s32.totalorder %s24, 0
      %p282 = por %p280, %p281
      %p283 = scmp.ne.s32.totalorder %s272, %s275
      %p284 = scmp.eq.s32.totalorder %s29, 3
      %p285 = por %p283, %p284
      %p286 = scmp.ne.s32.totalorder %s275, %s276
      %p287 = scmp.eq.s32.totalorder %s29, 0
      %p288 = por %p286, %p287
      %p289 = scmp.ne.s32.totalorder %s275, %s276
      %p290 = scmp.eq.s32.totalorder %s30, 3
      %p291 = por %p289, %p290
      %p293 = scmp.ne.s32.totalorder %s276, %s292
      %p294 = scmp.eq.s32.totalorder %s30, 0
      %p295 = por %p293, %p294
      %s296 = ssub.s32 %s31, %s43
      %s297 = ssub.s32 %s32, %s39
      %s298 = sor.u32 %s296, %s297
      %p299 = scmp.eq.s32.totalorder %s298, 0
      %s301 = sadd.s32 %s300, 1
      %s302 = scalar_select %p299, %s300, %s301
      %p305 = pneg %p299
      %p306 = scmp.eq.s32.totalorder %s24, 3
      %p307 = por %p305, %p306
      %p308 = scmp.ne.s32.totalorder %s300, %s303
      %p309 = scmp.eq.s32.totalorder %s24, 0
      %p310 = por %p308, %p309
      %p311 = scmp.ne.s32.totalorder %s300, %s303
      %p312 = scmp.eq.s32.totalorder %s29, 3
      %p313 = por %p311, %p312
      %p314 = scmp.ne.s32.totalorder %s303, %s304
      %p315 = scmp.eq.s32.totalorder %s29, 0
      %p316 = por %p314, %p315
      %p317 = scmp.ne.s32.totalorder %s303, %s304
      %p318 = scmp.eq.s32.totalorder %s30, 3
      %p319 = por %p317, %p318
      %p321 = scmp.ne.s32.totalorder %s304, %s320
      %p322 = scmp.eq.s32.totalorder %s30, 0
      %p323 = por %p321, %p322
      %p324 = scmp.le.s32.totalorder 1, %s24
      %p325 = scmp.lt.s32.totalorder %s24, 5
      %p326 = pnand %p324, %p325
      %p327 = pneg %p326
      // Predicated region
      $region9: #{tpu_custom_call.1} parent=5 // pred_check
        _
      $region10: #{tpu_custom_call.1} parent=5 // pred_check_branch
        %329 = sbr.rel (%p326) target = $region12
      $region11: #{tpu_custom_call.1} parent=5 // pred_region
        %s330 = ssub.s32 %s24, 1
        // Predicated region
        $region13: #{tpu_custom_call.1} parent=11 // pred_check
          %p331 = pneg %p85
        $region14: #{tpu_custom_call.1} parent=11 // pred_check_branch
          %333 = sbr.rel (%p331) target = $region16
        $region15: #{tpu_custom_call.1} parent=11 // pred_region
          _
        $region16: #{tpu_custom_call.1} parent=11 // pred_fallthru
          _
        // Predicated region
        $region17: #{tpu_custom_call.1} parent=11 // pred_check
          %p334 = pneg %p106
        $region18: #{tpu_custom_call.1} parent=11 // pred_check_branch
          %336 = sbr.rel (%p334) target = $region20
        $region19: #{tpu_custom_call.1} parent=11 // pred_region
          _
        $region20: #{tpu_custom_call.1} parent=11 // pred_fallthru
          _
        // Predicated region
        $region21: #{tpu_custom_call.1} parent=11 // pred_check
          %p337 = pneg %p127
        $region22: #{tpu_custom_call.1} parent=11 // pred_check_branch
          %339 = sbr.rel (%p337) target = $region24
        $region23: #{tpu_custom_call.1} parent=11 // pred_region
          _
        $region24: #{tpu_custom_call.1} parent=11 // pred_fallthru
          _
        // Predicated region
        $region25: #{tpu_custom_call.1} parent=11 // pred_check
          %p340 = pneg %p148
        $region26: #{tpu_custom_call.1} parent=11 // pred_check_branch
          %342 = sbr.rel (%p340) target = $region28
        $region27: #{tpu_custom_call.1} parent=11 // pred_region
          _
        $region28: #{tpu_custom_call.1} parent=11 // pred_fallthru
          _
        // Predicated region
        $region29: #{tpu_custom_call.1} parent=11 // pred_check
          %p343 = pneg %p169
        $region30: #{tpu_custom_call.1} parent=11 // pred_check_branch
          %345 = sbr.rel (%p343) target = $region32
        $region31: #{tpu_custom_call.1} parent=11 // pred_region
          _
        $region32: #{tpu_custom_call.1} parent=11 // pred_fallthru
          _
        // Predicated region
        $region33: #{tpu_custom_call.1} parent=11 // pred_check
          %p346 = pneg %p190
        $region34: #{tpu_custom_call.1} parent=11 // pred_check_branch
          %348 = sbr.rel (%p346) target = $region36
        $region35: #{tpu_custom_call.1} parent=11 // pred_region
          _
        $region36: #{tpu_custom_call.1} parent=11 // pred_fallthru
          _
        // Predicated region
        $region37: #{tpu_custom_call.1} parent=11 // pred_check
          %p349 = pneg %p211
        $region38: #{tpu_custom_call.1} parent=11 // pred_check_branch
          %351 = sbr.rel (%p349) target = $region40
        $region39: #{tpu_custom_call.1} parent=11 // pred_region
          _
        $region40: #{tpu_custom_call.1} parent=11 // pred_fallthru
          _
        // Predicated region
        $region41: #{tpu_custom_call.1} parent=11 // pred_check
          %p352 = pneg %p232
        $region42: #{tpu_custom_call.1} parent=11 // pred_check_branch
          %354 = sbr.rel (%p352) target = $region44
        $region43: #{tpu_custom_call.1} parent=11 // pred_region
          _
        $region44: #{tpu_custom_call.1} parent=11 // pred_fallthru
          _
      $region12: #{tpu_custom_call.1} parent=5 // pred_fallthru
        _
      %p355 = scmp.lt.s32.totalorder %s24, 4
      // Predicated region
      $region45: #{tpu_custom_call.1} parent=5 // pred_check
        %p356 = pneg %p355
      $region46: #{tpu_custom_call.1} parent=5 // pred_check_branch
        %358 = sbr.rel (%p356) target = $region48
      $region47: #{tpu_custom_call.1} parent=5 // pred_region
        // Predicated region
        $region49: #{tpu_custom_call.1} parent=47 // pred_check
          %p359 = pneg %p58
        $region50: #{tpu_custom_call.1} parent=47 // pred_check_branch
          %361 = sbr.rel (%p359) target = $region52
        $region51: #{tpu_custom_call.1} parent=47 // pred_region
          %s362 = smul.u32 2, %s32
          %p363 = scmp.lt.s32.totalorder %s31, 1
          %s364 = scalar_select %p363, %s31, 1
          %p365 = scmp.lt.s32.totalorder %s362, 3
          %s366 = scalar_select %p365, %s362, 3
          %s367 = smul.addr %s364, 4
          %s368 = sadd.s32 %s366, %s367
          %s369 = smul.addr %s368, 8
          %s370 = scalar_lea.vmem %s0, %s369
          %s371 = smul.u32 2, %s32
        $region52: #{tpu_custom_call.1} parent=47 // pred_fallthru
          _
      $region48: #{tpu_custom_call.1} parent=5 // pred_fallthru
        _
      %p372 = scmp.le.s32.totalorder 1, %s24
      %p373 = scmp.lt.s32.totalorder %s24, 5
      %p374 = pnand %p372, %p373
      %p375 = pneg %p374
      // Predicated region
      $region53: #{tpu_custom_call.1} parent=5 // pred_check
        _
      $region54: #{tpu_custom_call.1} parent=5 // pred_check_branch
        %377 = sbr.rel (%p374) target = $region56
      $region55: #{tpu_custom_call.1} parent=5 // pred_region
        %s378 = ssub.s32 %s24, 1
        %s379 = smul.u32 2, %s34
        %p380 = scmp.lt.s32.totalorder %s33, 1
        %s381 = scalar_select %p380, %s33, 1
        %p382 = scmp.lt.s32.totalorder %s379, 3
        %s383 = scalar_select %p382, %s379, 3
        %s384 = smul.addr %s381, 4
        %s385 = sadd.s32 %s383, %s384
        %s386 = smul.addr %s385, 8
        %s387 = scalar_lea.vmem %s0, %s386
        %p388 = pneg %p64
        %p389 = pneg %p61
        %p390 = pneg %p85
        %p391 = pneg %p82
        %p392 = pneg %p106
        %p393 = pneg %p103
        %p394 = pneg %p127
        %p395 = pneg %p124
        %p396 = pneg %p148
        %p397 = pneg %p145
        %p398 = pneg %p169
        %p399 = pneg %p166
        %p400 = pneg %p190
        %p401 = pneg %p187
        %p402 = pneg %p211
        %p403 = pneg %p208
        %p404 = pneg %p232
        %p405 = pneg %p229
        %p406 = pneg %p260
        %p407 = pneg %p257
        %s408 = smul.u32 2, %s34
        %p409 = scmp.lt.s32.totalorder %s33, 1
        %s410 = scalar_select %p409, %s33, 1
        %p411 = scmp.lt.s32.totalorder %s408, 3
        %s412 = scalar_select %p411, %s408, 3
        %s413 = smul.addr %s410, 4
        %s414 = sadd.s32 %s412, %s413
        %s415 = smul.addr %s414, 8
        %s416 = scalar_lea.vmem %s9, %s415
        %p417 = pneg %p288
        %p418 = pneg %p285
        %s419 = sand.u32 %s275, 1
        %s420 = scalar_lea.sflag [#allocation3], %s419
        %s421 = sand.u32 %s275, 1
        %s422 = smul.addr %s421, 8
        %s423 = scalar_lea.vmem [#allocation2], %s422
        %p424 = pneg %p316
        %p425 = pneg %p313
        %s426 = sand.u32 %s303, 1
        %s427 = scalar_lea.sflag [#allocation5], %s426
        %s428 = sand.u32 %s303, 1
        %s429 = smul.addr %s428, 8
        %s430 = scalar_lea.vmem [#allocation4], %s429
        %s431 = smul.u32 2, %s34
        %p432 = scmp.lt.s32.totalorder %s33, 1
        %s433 = scalar_select %p432, %s33, 1
        %p434 = scmp.lt.s32.totalorder %s431, 3
        %s435 = scalar_select %p434, %s431, 3
        %s436 = smul.addr %s433, 4
        %s437 = sadd.s32 %s435, %s436
        %s438 = smul.addr %s437, 8
        %s439 = scalar_lea.vmem %s0, %s438
        %s440 = smul.u32 2, %s34
        %s441 = smul.u32 2, %s34
        %p442 = scmp.lt.s32.totalorder %s33, 1
        %s443 = scalar_select %p442, %s33, 1
        %p444 = scmp.lt.s32.totalorder %s441, 3
        %s445 = scalar_select %p444, %s441, 3
        %s446 = smul.addr %s443, 4
        %s447 = sadd.s32 %s445, %s446
        %s448 = smul.addr %s447, 8
        %s449 = scalar_lea.vmem %s9, %s448
        %s450 = smul.u32 2, %s34
        %s451 = smul.u32 2, %s34
        %s452 = smul.u32 2, %s34
        %v454 = vld [vmem:[%s439] sm:$0xff]
        %v455 = vld [vmem:[%s439 + $0x8] sm:$0xff]
        %v456 = vld [vmem:[%s1] sm:$0x1]
        %v457 = vld [vmem:[%s2] sm:$0x1]
        %vm458 = vcmask 130048
        %v459 = vsel %vm458, %v454, 0.0
        %460 = vadd.xlane.f32.xlu0 %v459
        %v461 = vpop.xlane.xlu0 %460
        %v462 = vsel %vm458, %v455, 0.0
        %463 = vadd.xlane.f32.xlu0 %v462
        %v464 = vpop.xlane.xlu0 %463
        %v465 = vrcp.pop 16.0
        %v466 = vmul.f32 16.0, %v465
        %v467 = vsub.f32 1.0, %v466
        %v468 = vmul.f32 %v465, %v467
        %v469 = vadd.f32 %v465, %v468
        %vm470 = vweird.f32 %v465
        %v471 = vsel %vm470, %v465, %v469
        %v472 = vmul.f32 %v461, %v471
        %v473 = vmul.f32 %v464, %v471
        %v474 = vsub.f32 %v454, %v472
        %v475 = vsub.f32 %v455, %v473
        %v476 = vmul.f32 %v474, %v474
        %v477 = vmul.f32 %v475, %v475
        %v478 = vsel %vm458, %v476, 0.0
        %479 = vadd.xlane.f32.xlu0 %v478
        %v480 = vpop.xlane.xlu0 %479
        %v481 = vsel %vm458, %v477, 0.0
        %482 = vadd.xlane.f32.xlu0 %v481
        %v483 = vpop.xlane.xlu0 %482
        %v484 = vmul.f32 %v480, %v471
        %v485 = vmul.f32 %v483, %v471
        %v486 = vadd.f32 %v484, 1e-06
        %v487 = vadd.f32 %v485, 1e-06
        %v488 = vrsqrt.pop %v486
        %v489 = vmul.f32 %v488, %v486
        %v490 = vmul.f32 %v489, %v488
        %v491 = vmul.f32 0.5, %v490
        %v492 = vsub.f32 1.5, %v491
        %v493 = vmul.f32 %v488, %v492
        %vm494 = vweird.f32 %v486
        %vm495 = vweird.f32 %v488
        %vm496 = vmor %vm494, %vm495
        %v497 = vsel %vm496, %v488, %v493
        %v498 = vrsqrt.pop %v487
        %v499 = vmul.f32 %v498, %v487
        %v500 = vmul.f32 %v499, %v498
        %v501 = vmul.f32 0.5, %v500
        %v502 = vsub.f32 1.5, %v501
        %v503 = vmul.f32 %v498, %v502
        %vm504 = vweird.f32 %v487
        %vm505 = vweird.f32 %v498
        %vm506 = vmor %vm504, %vm505
        %v507 = vsel %vm506, %v498, %v503
        %v508 = vmul.f32 %v474, %v497
        %v509 = vmul.f32 %v475, %v507
        %v511 = vperm.slane %v456, 0
        %v513 = vmul.f32 %v508, %v511
        %v514 = vmul.f32 %v509, %v511
        %v516 = vperm.slane %v457, 0
        %v518 = vadd.f32 %v513, %v516
        %v519 = vadd.f32 %v514, %v516
        %520 = vst.msk [vmem:[%s449] sm:$0xff] %vm458, %v518
        %521 = vst.msk [vmem:[%s449 + $0x8] sm:$0xff] %vm458, %v519
        %v522 = vpack.c.bf16 %v519, %v518
        %v523 = vld [vmem:[%s5] sm:$0xf]
        %v524 = vld [vmem:[%s5 + $0x4] sm:$0xf]
        %v525 = vld [vmem:[%s6] sm:$0x1]
        %v527 = vperm.slane %v525, 0
        %v531 = vunpack.c.l.b16 %v523
        %v532 = vunpack.c.l.b16 %v524
        %v533 = vpack.c.b16 %v532, %v531
        %v536 = vsel %vm458, %v522, 0
        %538 = vmatpush.bf16.msra.mxu0 0
        %539 = vmatpush.bf16.msra.mxu0 0
        %540 = vmatpush.bf16.msra.mxu0 0
        %541 = vmatpush.bf16.msra.mxu0 0
        %542 = vmatpush.bf16.msra.mxu0 0
        %543 = vmatpush.bf16.msra.mxu0 0
        %544 = vmatpush.bf16.msra.mxu0 0
        %545 = vmatpush.bf16.msra.mxu0 %v533
        %546 = vmatmul.bf16.gmra.mxu0 %v536
        %v547 = vpop.f32.mrf.mxu0
        %v548 = vadd.f32 %v527, %v547
        %v549 = vpop.f32.mrf.mxu0
        %v550 = vadd.f32 %v527, %v549
        %551 = vdwg.mxu0
        %v552 = vmul.f32 %v548, 0.5
        %v553 = vmul.f32 %v550, 0.5
        %v554 = vmul.f32 %v548, 0.70710677
        %v555 = vmul.f32 %v550, 0.70710677
        %v556 = vmul.f32 %v554, %v554
        %v557 = vmin.f32 16.0, %v556
        %v558 = vmul.f32 %v557, 2.1237322e-06
        %v559 = vadd.f32 %v558, 0.00028619796
        %v560 = vmul.f32 %v557, %v559
        %v561 = vadd.f32 %v560, 0.0036580483
        %v562 = vmul.f32 %v557, %v561
        %v563 = vadd.f32 %v562, 0.05243302
        %v564 = vmul.f32 %v557, %v563
        %v565 = vadd.f32 %v564, 0.18741608
        %v566 = vmul.f32 %v557, %v565
        %v567 = vadd.f32 %v566, 1.1283791
        %v568 = vmul.f32 %v554, %v567
        %v569 = vmul.f32 %v557, 3.8918573e-05
        %v570 = vadd.f32 %v569, 0.001143296
        %v571 = vmul.f32 %v557, %v570
        %v572 = vadd.f32 %v571, 0.014752088
        %v573 = vmul.f32 %v557, %v572
        %v574 = vadd.f32 %v573, 0.112945676
        %v575 = vmul.f32 %v557, %v574
        %v576 = vadd.f32 %v575, 0.4994258
        %v577 = vmul.f32 %v557, %v576
        %v578 = vadd.f32 %v577, 1.0
        %v579 = vrcp.pop %v578
        %v580 = vmul.f32 %v578, %v579
        %v581 = vsub.f32 1.0, %v580
        %v582 = vmul.f32 %v579, %v581
        %v583 = vadd.f32 %v579, %v582
        %vm584 = vweird.f32 %v578
        %vm585 = vweird.f32 %v579
        %vm586 = vmor %vm584, %vm585
        %v587 = vsel %vm586, %v579, %v583
        %v588 = vand.u32 2147483647, %v578
        %vm589 = vcmp.eq.f32.partialorder %v588, 8.507059e+37
        %v590 = vand.u32 %v578, 2147483648
        %v591 = vor.u32 1.1754944e-38, %v590
        %v592 = vsel %vm589, %v591, %v587
        %v593 = vmul.f32 %v568, %v592
        %v594 = vmin.f32 %v593, 1.0
        %v595 = vmax.f32 %v594, -1.0
        %v596 = vmul.f32 %v555, %v555
        %v597 = vmin.f32 16.0, %v596
        %v598 = vmul.f32 %v597, 2.1237322e-06
        %v599 = vadd.f32 %v598, 0.00028619796
        %v600 = vmul.f32 %v597, %v599
        %v601 = vadd.f32 %v600, 0.0036580483
        %v602 = vmul.f32 %v597, %v601
        %v603 = vadd.f32 %v602, 0.05243302
        %v604 = vmul.f32 %v597, %v603
        %v605 = vadd.f32 %v604, 0.18741608
        %v606 = vmul.f32 %v597, %v605
        %v607 = vadd.f32 %v606, 1.1283791
        %v608 = vmul.f32 %v555, %v607
        %v609 = vmul.f32 %v597, 3.8918573e-05
        %v610 = vadd.f32 %v609, 0.001143296
        %v611 = vmul.f32 %v597, %v610
        %v612 = vadd.f32 %v611, 0.014752088
        %v613 = vmul.f32 %v597, %v612
        %v614 = vadd.f32 %v613, 0.112945676
        %v615 = vmul.f32 %v597, %v614
        %v616 = vadd.f32 %v615, 0.4994258
        %v617 = vmul.f32 %v597, %v616
        %v618 = vadd.f32 %v617, 1.0
        %v619 = vrcp.pop %v618
        %v620 = vmul.f32 %v618, %v619
        %v621 = vsub.f32 1.0, %v620
        %v622 = vmul.f32 %v619, %v621
        %v623 = vadd.f32 %v619, %v622
        %vm624 = vweird.f32 %v618
        %vm625 = vweird.f32 %v619
        %vm626 = vmor %vm624, %vm625
        %v627 = vsel %vm626, %v619, %v623
        %v628 = vand.u32 2147483647, %v618
        %vm629 = vcmp.eq.f32.partialorder %v628, 8.507059e+37
        %v630 = vand.u32 %v618, 2147483648
        %v631 = vor.u32 1.1754944e-38, %v630
        %v632 = vsel %vm629, %v631, %v627
        %v633 = vmul.f32 %v608, %v632
        %v634 = vmin.f32 %v633, 1.0
        %v635 = vmax.f32 %v634, -1.0
        %v636 = vadd.f32 %v595, 1.0
        %v637 = vadd.f32 %v635, 1.0
        %v638 = vmul.f32 %v552, %v636
        %v639 = vmul.f32 %v553, %v637
        %v640 = vld [vmem:[%s7] sm:$0x1]
        %v641 = vld [vmem:[%s8] sm:$0x1]
        %vm642 = vcmask 261120
        %v643 = vsel %vm642, %v638, 0.0
        %644 = vadd.xlane.f32.xlu0 %v643
        %v645 = vpop.xlane.xlu0 %644
        %v646 = vsel %vm642, %v639, 0.0
        %647 = vadd.xlane.f32.xlu0 %v646
        %v648 = vpop.xlane.xlu0 %647
        %v649 = vrcp.pop 32.0
        %v650 = vmul.f32 32.0, %v649
        %v651 = vsub.f32 1.0, %v650
        %v652 = vmul.f32 %v649, %v651
        %v653 = vadd.f32 %v649, %v652
        %vm654 = vweird.f32 %v649
        %v655 = vsel %vm654, %v649, %v653
        %v656 = vmul.f32 %v645, %v655
        %v657 = vmul.f32 %v648, %v655
        %v658 = vsub.f32 %v638, %v656
        %v659 = vsub.f32 %v639, %v657
        %v660 = vmul.f32 %v658, %v658
        %v661 = vmul.f32 %v659, %v659
        %v662 = vsel %vm642, %v660, 0.0
        %663 = vadd.xlane.f32.xlu0 %v662
        %v664 = vpop.xlane.xlu0 %663
        %v665 = vsel %vm642, %v661, 0.0
        %666 = vadd.xlane.f32.xlu0 %v665
        %v667 = vpop.xlane.xlu0 %666
        %v668 = vmul.f32 %v664, %v655
        %v669 = vmul.f32 %v667, %v655
        %v670 = vadd.f32 %v668, 1e-05
        %v671 = vadd.f32 %v669, 1e-05
        %v672 = vrsqrt.pop %v670
        %v673 = vmul.f32 %v672, %v670
        %v674 = vmul.f32 %v673, %v672
        %v675 = vmul.f32 0.5, %v674
        %v676 = vsub.f32 1.5, %v675
        %v677 = vmul.f32 %v672, %v676
        %vm678 = vweird.f32 %v670
        %vm679 = vweird.f32 %v672
        %vm680 = vmor %vm678, %vm679
        %v681 = vsel %vm680, %v672, %v677
        %v682 = vrsqrt.pop %v671
        %v683 = vmul.f32 %v682, %v671
        %v684 = vmul.f32 %v683, %v682
        %v685 = vmul.f32 0.5, %v684
        %v686 = vsub.f32 1.5, %v685
        %v687 = vmul.f32 %v682, %v686
        %vm688 = vweird.f32 %v671
        %vm689 = vweird.f32 %v682
        %vm690 = vmor %vm688, %vm689
        %v691 = vsel %vm690, %v682, %v687
        %v692 = vmul.f32 %v658, %v681
        %v693 = vmul.f32 %v659, %v691
        %v695 = vperm.slane %v640, 0
        %v697 = vmul.f32 %v692, %v695
        %v698 = vmul.f32 %v693, %v695
        %v700 = vperm.slane %v641, 0
        %v702 = vadd.f32 %v697, %v700
        %v703 = vadd.f32 %v698, %v700
        %v704 = vpack.c.bf16 %v702, %v702
        %v705 = vpack.c.bf16 %v703, %v703
        %vm706 = vcmask 257024
        %707 = vst.msk [vmem:[%s430] sm:$0xf] %vm706, %v704
        %708 = vst.msk [vmem:[%s430 + $0x4] sm:$0xf] %vm706, %v705
        %v709 = vld [vmem:[%s3] sm:$0xf]
        %v710 = vld [vmem:[%s3 + $0x4] sm:$0xf]
        %v711 = vld [vmem:[%s4] sm:$0x1]
        %v713 = vperm.slane %v711, 0
        %v717 = vunpack.c.l.b16 %v709
        %v718 = vunpack.c.l.b16 %v710
        %v719 = vpack.c.b16 %v718, %v717
        %721 = vmatpush.bf16.msra.mxu0 0
        %722 = vmatpush.bf16.msra.mxu0 0
        %723 = vmatpush.bf16.msra.mxu0 0
        %724 = vmatpush.bf16.msra.mxu0 0
        %725 = vmatpush.bf16.msra.mxu0 0
        %726 = vmatpush.bf16.msra.mxu0 0
        %727 = vmatpush.bf16.msra.mxu0 0
        %728 = vmatpush.bf16.msra.mxu0 %v719
        %729 = vmatmul.bf16.gmra.mxu0 %v536
        %v730 = vpop.f32.mrf.mxu0
        %v731 = vadd.f32 %v713, %v730
        %v732 = vpop.f32.mrf.mxu0
        %v733 = vadd.f32 %v713, %v732
        %734 = vdwg.mxu0
        %v735 = vmul.f32 %v731, 0.5
        %v736 = vmul.f32 %v733, 0.5
        %v737 = vmul.f32 %v731, 0.70710677
        %v738 = vmul.f32 %v733, 0.70710677
        %v739 = vmul.f32 %v737, %v737
        %v740 = vmin.f32 16.0, %v739
        %v741 = vmul.f32 %v740, 2.1237322e-06
        %v742 = vadd.f32 %v741, 0.00028619796
        %v743 = vmul.f32 %v740, %v742
        %v744 = vadd.f32 %v743, 0.0036580483
        %v745 = vmul.f32 %v740, %v744
        %v746 = vadd.f32 %v745, 0.05243302
        %v747 = vmul.f32 %v740, %v746
        %v748 = vadd.f32 %v747, 0.18741608
        %v749 = vmul.f32 %v740, %v748
        %v750 = vadd.f32 %v749, 1.1283791
        %v751 = vmul.f32 %v737, %v750
        %v752 = vmul.f32 %v740, 3.8918573e-05
        %v753 = vadd.f32 %v752, 0.001143296
        %v754 = vmul.f32 %v740, %v753
        %v755 = vadd.f32 %v754, 0.014752088
        %v756 = vmul.f32 %v740, %v755
        %v757 = vadd.f32 %v756, 0.112945676
        %v758 = vmul.f32 %v740, %v757
        %v759 = vadd.f32 %v758, 0.4994258
        %v760 = vmul.f32 %v740, %v759
        %v761 = vadd.f32 %v760, 1.0
        %v762 = vrcp.pop %v761
        %v763 = vmul.f32 %v761, %v762
        %v764 = vsub.f32 1.0, %v763
        %v765 = vmul.f32 %v762, %v764
        %v766 = vadd.f32 %v762, %v765
        %vm767 = vweird.f32 %v761
        %vm768 = vweird.f32 %v762
        %vm769 = vmor %vm767, %vm768
        %v770 = vsel %vm769, %v762, %v766
        %v771 = vand.u32 2147483647, %v761
        %vm772 = vcmp.eq.f32.partialorder %v771, 8.507059e+37
        %v773 = vand.u32 %v761, 2147483648
        %v774 = vor.u32 1.1754944e-38, %v773
        %v775 = vsel %vm772, %v774, %v770
        %v776 = vmul.f32 %v751, %v775
        %v777 = vmin.f32 %v776, 1.0
        %v778 = vmax.f32 %v777, -1.0
        %v779 = vmul.f32 %v738, %v738
        %v780 = vmin.f32 16.0, %v779
        %v781 = vmul.f32 %v780, 2.1237322e-06
        %v782 = vadd.f32 %v781, 0.00028619796
        %v783 = vmul.f32 %v780, %v782
        %v784 = vadd.f32 %v783, 0.0036580483
        %v785 = vmul.f32 %v780, %v784
        %v786 = vadd.f32 %v785, 0.05243302
        %v787 = vmul.f32 %v780, %v786
        %v788 = vadd.f32 %v787, 0.18741608
        %v789 = vmul.f32 %v780, %v788
        %v790 = vadd.f32 %v789, 1.1283791
        %v791 = vmul.f32 %v738, %v790
        %v792 = vmul.f32 %v780, 3.8918573e-05
        %v793 = vadd.f32 %v792, 0.001143296
        %v794 = vmul.f32 %v780, %v793
        %v795 = vadd.f32 %v794, 0.014752088
        %v796 = vmul.f32 %v780, %v795
        %v797 = vadd.f32 %v796, 0.112945676
        %v798 = vmul.f32 %v780, %v797
        %v799 = vadd.f32 %v798, 0.4994258
        %v800 = vmul.f32 %v780, %v799
        %v801 = vadd.f32 %v800, 1.0
        %v802 = vrcp.pop %v801
        %v803 = vmul.f32 %v801, %v802
        %v804 = vsub.f32 1.0, %v803
        %v805 = vmul.f32 %v802, %v804
        %v806 = vadd.f32 %v802, %v805
        %vm807 = vweird.f32 %v801
        %vm808 = vweird.f32 %v802
        %vm809 = vmor %vm807, %vm808
        %v810 = vsel %vm809, %v802, %v806
        %v811 = vand.u32 2147483647, %v801
        %vm812 = vcmp.eq.f32.partialorder %v811, 8.507059e+37
        %v813 = vand.u32 %v801, 2147483648
        %v814 = vor.u32 1.1754944e-38, %v813
        %v815 = vsel %vm812, %v814, %v810
        %v816 = vmul.f32 %v791, %v815
        %v817 = vmin.f32 %v816, 1.0
        %v818 = vmax.f32 %v817, -1.0
        %v819 = vadd.f32 %v778, 1.0
        %v820 = vadd.f32 %v818, 1.0
        %v821 = vmul.f32 %v735, %v819
        %v822 = vmul.f32 %v736, %v820
        %v823 = vpack.c.bf16 %v821, %v821
        %v824 = vpack.c.bf16 %v822, %v822
        %825 = vst.msk [vmem:[%s423] sm:$0xf] %vm706, %v823
        %826 = vst.msk [vmem:[%s423 + $0x4] sm:$0xf] %vm706, %v824
        %s827 = smul.u32 2, %s34
        %p828 = scmp.lt.s32.totalorder %s33, 1
        %s829 = scalar_select %p828, %s33, 1
        %p830 = scmp.lt.s32.totalorder %s827, 3
        %s831 = scalar_select %p830, %s827, 3
        %s832 = smul.addr %s829, 4
        %s833 = sadd.s32 %s831, %s832
        %s834 = smul.addr %s833, 8
        %s835 = scalar_lea.vmem %s9, %s834
        %s836 = sand.u32 %s275, 1
        %s837 = scalar_lea.sflag [#allocation3], %s836
        %s838 = sand.u32 %s275, 1
        %s839 = smul.addr %s838, 8
        %s840 = scalar_lea.vmem [#allocation2], %s839
        %s841 = sand.u32 %s303, 1
        %s842 = scalar_lea.sflag [#allocation5], %s841
        %s843 = sand.u32 %s303, 1
        %s844 = smul.addr %s843, 8
        %s845 = scalar_lea.vmem [#allocation4], %s844
        // Predicated region
        $region57: #{tpu_custom_call.1} parent=55 // pred_check
          %p846 = pneg %p257
        $region58: #{tpu_custom_call.1} parent=55 // pred_check_branch
          %848 = sbr.rel (%p846) target = $region60
        $region59: #{tpu_custom_call.1} parent=55 // pred_region
          %s849 = smul.u32 2, %s34
        $region60: #{tpu_custom_call.1} parent=55 // pred_fallthru
          _
        // Predicated region
        $region61: #{tpu_custom_call.1} parent=55 // pred_check
          %p850 = pneg %p285
        $region62: #{tpu_custom_call.1} parent=55 // pred_check_branch
          %852 = sbr.rel (%p850) target = $region64
        $region63: #{tpu_custom_call.1} parent=55 // pred_region
          %s853 = smul.u32 2, %s34
          %855 = vsyncadd %s837, 0
          %s856 = smul.addr %s33, 4
          %s857 = sadd.s32 %s853, %s856
          %s858 = smul.addr %s857, 4
          %s859 = scalar_lea.hbm %s10, %s858
          %s860 = sshll.u32 %s840, 4
          %s861 = int_to_ptr.vmem [resolvable:$true] %s860
          %s862 = sshll.u32 %s859, 4
          %s863 = int_to_ptr.hbm [resolvable:$true] %s862
          %868 = dma.vmem_to_hbm [thread:$0]  %s861, 128, %s863, %s837, 64, 64, 4
        $region64: #{tpu_custom_call.1} parent=55 // pred_fallthru
          _
        // Predicated region
        $region65: #{tpu_custom_call.1} parent=55 // pred_check
          %p869 = pneg %p313
        $region66: #{tpu_custom_call.1} parent=55 // pred_check_branch
          %871 = sbr.rel (%p869) target = $region68
        $region67: #{tpu_custom_call.1} parent=55 // pred_region
          %s872 = smul.u32 2, %s34
          %874 = vsyncadd %s842, 0
          %s875 = smul.addr %s33, 4
          %s876 = sadd.s32 %s872, %s875
          %s877 = smul.addr %s876, 4
          %s878 = scalar_lea.hbm %s11, %s877
          %s879 = sshll.u32 %s845, 4
          %s880 = int_to_ptr.vmem [resolvable:$true] %s879
          %s881 = sshll.u32 %s878, 4
          %s882 = int_to_ptr.hbm [resolvable:$true] %s881
          %887 = dma.vmem_to_hbm [thread:$0]  %s880, 128, %s882, %s842, 64, 64, 4
        $region68: #{tpu_custom_call.1} parent=55 // pred_fallthru
          _
      $region56: #{tpu_custom_call.1} parent=5 // pred_fallthru
        _
      %p888 = scmp.le.s32.totalorder 2, %s24
      // Predicated region
      $region69: #{tpu_custom_call.1} parent=5 // pred_check
        %p889 = pneg %p888
      $region70: #{tpu_custom_call.1} parent=5 // pred_check_branch
        %891 = sbr.rel (%p889) target = $region72
      $region71: #{tpu_custom_call.1} parent=5 // pred_region
        %s892 = ssub.s32 %s24, 2
        // Predicated region
        $region73: #{tpu_custom_call.1} parent=71 // pred_check
          %p893 = pneg %p263
        $region74: #{tpu_custom_call.1} parent=71 // pred_check_branch
          %895 = sbr.rel (%p893) target = $region76
        $region75: #{tpu_custom_call.1} parent=71 // pred_region
          %s896 = smul.u32 2, %s36
          %p897 = scmp.lt.s32.totalorder %s35, 1
          %s898 = scalar_select %p897, %s35, 1
          %p899 = scmp.lt.s32.totalorder %s896, 3
          %s900 = scalar_select %p899, %s896, 3
          %s901 = smul.addr %s898, 4
          %s902 = sadd.s32 %s900, %s901
          %s903 = smul.addr %s902, 8
          %s904 = scalar_lea.vmem %s9, %s903
        $region76: #{tpu_custom_call.1} parent=71 // pred_fallthru
          _
        // Predicated region
        $region77: #{tpu_custom_call.1} parent=71 // pred_check
          %p905 = pneg %p291
        $region78: #{tpu_custom_call.1} parent=71 // pred_check_branch
          %907 = sbr.rel (%p905) target = $region80
        $region79: #{tpu_custom_call.1} parent=71 // pred_region
          %s908 = sand.u32 %s276, 1
          %s909 = scalar_lea.sflag [#allocation3], %s908
          %s910 = sand.u32 %s276, 1
          %s911 = smul.addr %s910, 8
          %s912 = scalar_lea.vmem [#allocation2], %s911
          %914 = dma.done %s909, 128
        $region80: #{tpu_custom_call.1} parent=71 // pred_fallthru
          _
        // Predicated region
        $region81: #{tpu_custom_call.1} parent=71 // pred_check
          %p915 = pneg %p319
        $region82: #{tpu_custom_call.1} parent=71 // pred_check_branch
          %917 = sbr.rel (%p915) target = $region84
        $region83: #{tpu_custom_call.1} parent=71 // pred_region
          %s918 = sand.u32 %s304, 1
          %s919 = scalar_lea.sflag [#allocation5], %s918
          %s920 = sand.u32 %s304, 1
          %s921 = smul.addr %s920, 8
          %s922 = scalar_lea.vmem [#allocation4], %s921
          %924 = dma.done %s919, 128
        $region84: #{tpu_custom_call.1} parent=71 // pred_fallthru
          _
      $region72: #{tpu_custom_call.1} parent=5 // pred_fallthru
        _
    $region6: #{tpu_custom_call.1} parent=1 // loop_footer
      %s28 = sadd.s32 1, %s24
    $region7: #{tpu_custom_call.1} parent=1 // loop_footer_branch
      %23 = sbr.rel target = $region3
    $region8: #{tpu_custom_call.1} parent=1 // loop_exit
      _
    %925 = vsyncpa [#allocation3], 1
    %s926 = scalar_lea.sflag [#allocation3], 1
    %927 = vsyncpa %s926, 1
    %928 = vsyncpa [#allocation5], 1
    %s929 = scalar_lea.sflag [#allocation5], 1
    %930 = vsyncpa %s929, 1

</llo_original>
